<compile_context>
chip_gen: v6e
topology: v6e:2x2x1
jax: 0.10.0
libtpu: 0.0.40
codegen_flags: <defaults>
</compile_context>

<pallas_src>
import functools

import jax
import jax.numpy as jnp
from jax.experimental import pallas as pl
from jax.experimental.pallas import tpu as pltpu


# ---------------------------------------------------------------------------
# Kernels
# ---------------------------------------------------------------------------

def _fused_matmul_kernel(x_ref, w_ref, b_ref, o_ref, acc_ref):
    """No-split case: one lane-dense matmul (batch, in) @ (in, k*out)."""
    kk = pl.program_id(2)

    @pl.when(kk == 0)
    def _init():
        # Fold the bias add into the accumulator init (broadcast hoisted out
        # of the K loop).
        acc_ref[...] = jnp.broadcast_to(
            b_ref[...].astype(jnp.float32), acc_ref.shape)

    acc_ref[...] += jnp.dot(
        x_ref[...], w_ref[...], preferred_element_type=jnp.float32)

    @pl.when(kk == pl.num_programs(2) - 1)
    def _store():
        o_ref[...] = acc_ref[...].astype(o_ref.dtype)


def _split_matmul_kernel(x_ref, w_ref, b_ref, o_ref, acc_ref):
    """Split case: member i consumes its own column slice of x; the slice is
    selected by the x BlockSpec index_map (no transpose / copy of x)."""
    kk = pl.program_id(2)

    @pl.when(kk == 0)
    def _init():
        acc_ref[...] = jnp.broadcast_to(
            b_ref[0].astype(jnp.float32), acc_ref.shape)

    acc_ref[...] += jnp.dot(
        x_ref[...], w_ref[0], preferred_element_type=jnp.float32)

    @pl.when(kk == pl.num_programs(2) - 1)
    def _store():
        o_ref[0] = acc_ref[...].astype(o_ref.dtype)


# ---------------------------------------------------------------------------
# pallas_call wrappers
# ---------------------------------------------------------------------------

def _pick_tile(dim, pref):
    """Whole dim if small; the MXU-friendly preferred tile when it divides
    evenly; otherwise fall back to the full dim (demo shapes are tiny, so the
    fallback never blows VMEM).  For v7x's 64 MiB VMEM re-derive `pref` if you
    raise the defaults below."""
    if dim <= pref:
        return dim
    if dim % pref == 0:
        return pref
    return dim


@functools.partial(jax.jit, static_argnames=("tm", "tn", "tk"))
def _fused_linear_pallas(x, w, b, *, tm, tn, tk):
    m, k_dim = x.shape
    n = w.shape[1]
    out_dtype = jnp.promote_types(x.dtype, w.dtype)
    grid = (m // tm, n // tn, k_dim // tk)
    return pl.pallas_call(
        _fused_matmul_kernel,
        out_shape=jax.ShapeDtypeStruct((m, n), out_dtype),
        grid=grid,
        in_specs=[
            pl.BlockSpec((tm, tk), lambda i, j, kk: (i, kk)),
            pl.BlockSpec((tk, tn), lambda i, j, kk: (kk, j)),
            pl.BlockSpec((1, tn), lambda i, j, kk: (0, j)),
        ],
        out_specs=pl.BlockSpec((tm, tn), lambda i, j, kk: (i, j)),
        scratch_shapes=[pltpu.VMEM((tm, tn), jnp.float32)],
        compiler_params=pltpu.CompilerParams(
            dimension_semantics=("parallel", "parallel", "arbitrary")),
    )(x, w, b)


@functools.partial(jax.jit, static_argnames=("tm", "tk"))
def _split_linear_pallas(x, w, b, *, tm, tk):
    m = x.shape[0]
    k, u, n = w.shape
    kt = u // tk  # K-blocks per ensemble member
    out_dtype = jnp.promote_types(x.dtype, w.dtype)
    grid = (k, m // tm, kt)
    return pl.pallas_call(
        _split_matmul_kernel,
        out_shape=jax.ShapeDtypeStruct((k, m, n), out_dtype),
        grid=grid,
        in_specs=[
            # x stays 2-D; column-block index i*kt + kk selects member i's
            # chunk (and its kk-th K tile) directly in the DMA.
            pl.BlockSpec((tm, tk), lambda i, mi, kk: (mi, i * kt + kk)),
            pl.BlockSpec((1, tk, n), lambda i, mi, kk: (i, kk, 0)),
            pl.BlockSpec((1, 1, n), lambda i, mi, kk: (i, 0, 0)),
        ],
        out_specs=pl.BlockSpec((1, tm, n), lambda i, mi, kk: (i, mi, 0)),
        scratch_shapes=[pltpu.VMEM((tm, n), jnp.float32)],
        compiler_params=pltpu.CompilerParams(
            dimension_semantics=("parallel", "parallel", "arbitrary")),
    )(x, w, b)


# ---------------------------------------------------------------------------
# Module wrapper
# ---------------------------------------------------------------------------

class EnsLinearPallas:
    """JAX/Pallas port of EnsLinear. __call__ returns a list of k arrays of
    shape (1, batch, out_dim), matching the PyTorch module's forward."""

    # Preferred tile sizes: 256-multiples for the M/N (MXU 2x256^2 on v6e/v7x,
    # still 128-aligned for v5e's 4x128^2); the picker falls back to the full
    # dim for tiny shapes.
    _TM, _TN, _TK = 256, 256, 512

    def __init__(self, k, in_dim, out_dim, batch_size, noise_wei, key):
        self.k = k
        self.in_dim = in_dim
        self.out_dim = out_dim
        self.split = in_dim > 256
        self.in_dim_unit = in_dim // k if self.split else in_dim

        # Deterministic parameter init (mimics nn.Linear's uniform range).
        bound = 1.0 / (self.in_dim_unit ** 0.5)
        keys = jax.random.split(key, 3 * k)
        ws, bs = [], []
        for i in range(k):
            w = jax.random.uniform(
                keys[3 * i], (self.in_dim_unit, out_dim),
                minval=-bound, maxval=bound, dtype=jnp.float32)
            b = jax.random.uniform(
                keys[3 * i + 1], (1, out_dim),
                minval=-bound, maxval=bound, dtype=jnp.float32)
            ws.append(w)
            bs.append(b)
        # Per-member params kept for the pure-JAX reference.
        self.w_list, self.b_list = ws, bs

        # Kernel-side parameter layouts.
        # TODO(synk): optionally keep these as bf16 (with f32 MXU accumulation)
        # to halve weight-stream HBM bytes; kept f32 to match torch numerics.
        if self.split:
            self.w_stacked = jnp.stack(ws, axis=0)        # (k, u, out_dim)
            self.b_stacked = jnp.stack(bs, axis=0)        # (k, 1, out_dim)
        else:
            # Fuse all k members into ONE lane-dense matmul.
            self.w_cat = jnp.concatenate(ws, axis=1)      # (in_dim, k*out_dim)
            self.b_cat = jnp.concatenate(bs, axis=1)      # (1,      k*out_dim)

        # teacher_noises analogue (global side effect in torch, unused in fwd).
        self.teacher_noises = [
            jax.random.normal(keys[3 * i + 2], (batch_size, out_dim),
                              dtype=jnp.float32) * noise_wei
            for i in range(k)
        ]

    def __call__(self, x):
        batch = x.shape[0]
        if self.split:
            tm = _pick_tile(batch, self._TM)
            tk = _pick_tile(self.in_dim_unit, self._TK)
            out = _split_linear_pallas(
                x, self.w_stacked, self.b_stacked, tm=tm, tk=tk)
            # (k, batch, out_dim) -> k x (1, batch, out_dim) with one split.
            return jnp.split(out, self.k, axis=0)
        else:
            tm = _pick_tile(batch, self._TM)
            tn = _pick_tile(self.k * self.out_dim, self._TN)
            tk = _pick_tile(self.in_dim, self._TK)
            out2d = _fused_linear_pallas(
                x, self.w_cat, self.b_cat, tm=tm, tn=tn, tk=tk)
            # (batch, k*out) -> (k, batch, out_dim) -> list (single
            # reshape/transpose on the tiny output, not on x).
            out3 = out2d.reshape(batch, self.k, self.out_dim).transpose(1, 0, 2)
            return jnp.split(out3, self.k, axis=0)


# ---------------------------------------------------------------------------
# Pure-JAX reference replicating the PyTorch forward
# ---------------------------------------------------------------------------

def _reference(x, module):
    outs = []
    for i in range(module.k):
        if module.split:
            off_b = i * module.in_dim_unit
            off_e = (i + 1) * module.in_dim_unit
        else:
            off_b, off_e = 0, module.in_dim_unit
        y = x[:, off_b:off_e] @ module.w_list[i] + module.b_list[i]
        outs.append(y[None])
    return outs


if __name__ == "__main__":
    key = jax.random.PRNGKey(0)
    k_init, k_x1, k_x2 = jax.random.split(key, 3)

    # Case 1: no split (in_dim <= 256): every linear sees the full input;
    # all k members fused into one lane-dense matmul.
    k_ens, in_dim, out_dim, batch = 4, 32, 16, 8
    mod = EnsLinearPallas(k_ens, in_dim, out_dim, batch, noise_wei=0.1, key=k_init)
    x = jax.random.normal(k_x1, (batch, in_dim), dtype=jnp.float32)
    outs = [jax.block_until_ready(o) for o in mod(x)]
    refs = _reference(x, mod)
    for o, r in zip(outs, refs):
        assert o.shape == (1, batch, out_dim)
        assert jnp.allclose(o, r, atol=1e-5, rtol=1e-5), "mismatch (no-split case)"

    # Case 2: split (in_dim > 256): each linear sees its own input chunk,
    # selected by the BlockSpec index_map (no wrapper transpose of x).
    k_ens2, in_dim2, out_dim2, batch2 = 2, 512, 16, 8
    mod2 = EnsLinearPallas(k_ens2, in_dim2, out_dim2, batch2, noise_wei=0.1, key=k_init)
    x2 = jax.random.normal(k_x2, (batch2, in_dim2), dtype=jnp.float32)
    outs2 = [jax.block_until_ready(o) for o in mod2(x2)]
    refs2 = _reference(x2, mod2)
    for o, r in zip(outs2, refs2):
        assert o.shape == (1, batch2, out_dim2)
        assert jnp.allclose(o, r, atol=1e-5, rtol=1e-5), "mismatch (split case)"

    print("KERNEL_OK")
</pallas_src>

<mosaic_0001>
module attributes {stable_mosaic.version = 11 : i64} {
  func.func @_fused_matmul_kernel(%arg0: i32, %arg1: i32, %arg2: i32, %arg3: memref<8x32xf32, #tpu.memory_space<vmem>>, %arg4: memref<32x64xf32, #tpu.memory_space<vmem>>, %arg5: memref<1x64xf32, #tpu.memory_space<vmem>>, %arg6: memref<8x64xf32, #tpu.memory_space<vmem>>, %arg7: memref<8x64xf32, #tpu.memory_space<vmem>>) attributes {dimension_semantics = [#tpu.dimension_semantics<parallel>, #tpu.dimension_semantics<parallel>, #tpu.dimension_semantics<arbitrary>], iteration_bounds = array<i64: 1, 1, 1>, scalar_prefetch = 0 : i64, scratch_operands = 1 : i64, tpu.core_type = #tpu.core_type<tc>, window_params = [{transform_indices = @transform_0, window_bounds = array<i64: 8, 32>}, {transform_indices = @transform_1, window_bounds = array<i64: 32, 64>}, {transform_indices = @transform_2, window_bounds = array<i64: 1, 64>}, {transform_indices = @transform_3, window_bounds = array<i64: 8, 64>}]} {
    %c0_i32 = arith.constant 0 : i32
    %0 = arith.cmpi eq, %arg2, %c0_i32 : i32
    %1 = arith.extui %0 : i1 to i32
    %c0_i32_0 = arith.constant 0 : i32
    %2 = arith.cmpi ne, %1, %c0_i32_0 : i32
    scf.if %2 {
      %c0_10 = arith.constant 0 : index
      %c0_11 = arith.constant 0 : index
      %12 = vector.load %arg5[%c0_10, %c0_11] : memref<1x64xf32, #tpu.memory_space<vmem>>, vector<1x64xf32>
      %13 = vector.shape_cast %12 : vector<1x64xf32> to vector<1x64xf32>
      %14 = vector.broadcast %13 : vector<1x64xf32> to vector<8x64xf32>
      %c0_12 = arith.constant 0 : index
      %c0_13 = arith.constant 0 : index
      %15 = vector.load %arg7[%c0_12, %c0_13] : memref<8x64xf32, #tpu.memory_space<vmem>>, vector<8x64xf32>
      tpu.vector_store %arg7[%c0_12, %c0_13], %14 {strides = array<i32>} : memref<8x64xf32, #tpu.memory_space<vmem>>, vector<8x64xf32>,
    } else {
    }
    %c0 = arith.constant 0 : index
    %c0_1 = arith.constant 0 : index
    %3 = vector.load %arg7[%c0, %c0_1] : memref<8x64xf32, #tpu.memory_space<vmem>>, vector<8x64xf32>
    %c0_2 = arith.constant 0 : index
    %c0_3 = arith.constant 0 : index
    %4 = vector.load %arg3[%c0_2, %c0_3] : memref<8x32xf32, #tpu.memory_space<vmem>>, vector<8x32xf32>
    %c0_4 = arith.constant 0 : index
    %c0_5 = arith.constant 0 : index
    %5 = vector.load %arg4[%c0_4, %c0_5] : memref<32x64xf32, #tpu.memory_space<vmem>>, vector<32x64xf32>
    %cst = arith.constant dense<0.000000e+00> : vector<8x64xf32>
    %6 = tpu.matmul %4, %5, %cst {dimension_numbers = #tpu.dot_dimension_numbers<[1], [0], [0], [1], [0, 0, 1, 1], [], []>} : vector<8x32xf32>, vector<32x64xf32>, vector<8x64xf32> -> vector<8x64xf32>
    %7 = arith.addf %3, %6 : vector<8x64xf32>
    %c0_6 = arith.constant 0 : index
    %c0_7 = arith.constant 0 : index
    %8 = vector.load %arg7[%c0_6, %c0_7] : memref<8x64xf32, #tpu.memory_space<vmem>>, vector<8x64xf32>
    tpu.vector_store %arg7[%c0_6, %c0_7], %7 {strides = array<i32>} : memref<8x64xf32, #tpu.memory_space<vmem>>, vector<8x64xf32>,
    %c0_i32_8 = arith.constant 0 : i32
    %9 = arith.cmpi eq, %arg2, %c0_i32_8 : i32
    %10 = arith.extui %9 : i1 to i32
    %c0_i32_9 = arith.constant 0 : i32
    %11 = arith.cmpi ne, %10, %c0_i32_9 : i32
    scf.if %11 {
      %c0_10 = arith.constant 0 : index
      %c0_11 = arith.constant 0 : index
      %12 = vector.load %arg7[%c0_10, %c0_11] : memref<8x64xf32, #tpu.memory_space<vmem>>, vector<8x64xf32>
      %c0_12 = arith.constant 0 : index
      %c0_13 = arith.constant 0 : index
      %13 = vector.load %arg6[%c0_12, %c0_13] : memref<8x64xf32, #tpu.memory_space<vmem>>, vector<8x64xf32>
      tpu.vector_store %arg6[%c0_12, %c0_13], %12 {strides = array<i32>} : memref<8x64xf32, #tpu.memory_space<vmem>>, vector<8x64xf32>,
    } else {
    }
    return
  }
  func.func @transform_0(%arg0: i32, %arg1: i32, %arg2: i32) -> (i32, i32) {
    %c0_i32 = arith.constant 0 : i32
    return %arg0, %arg2 : i32, i32
  }
  func.func @transform_1(%arg0: i32, %arg1: i32, %arg2: i32) -> (i32, i32) {
    %c0_i32 = arith.constant 0 : i32
    return %arg2, %arg1 : i32, i32
  }
  func.func @transform_2(%arg0: i32, %arg1: i32, %arg2: i32) -> (i32, i32) {
    %c0_i32 = arith.constant 0 : i32
    %c0_i32_0 = arith.constant 0 : i32
    return %c0_i32, %arg1 : i32, i32
  }
  func.func @transform_3(%arg0: i32, %arg1: i32, %arg2: i32) -> (i32, i32) {
    %c0_i32 = arith.constant 0 : i32
    return %arg0, %arg1 : i32, i32
  }
}

</mosaic_0001>

<llo_original>
// kernel: _fused_linear_pallas.1
$region0: #{_fused_linear_pallas.1}
  #allocation0 [shape = 'u32[]', space=smem, size = 0x4, offset = 0x4, fixed_abs, tag = 'smem constant byte address 0x4 - core index']
  #allocation1 [shape = 'u32[144,128]{1,0:T(1,128)}', space=vmem, size = 0x12000, scoped, tag = 'internal scratch']
  #allocation2 [shape = 'f32[8,64]{1,0:T(8,128)}', space=vmem, size = 0x1000, scoped, tag = 'scratch operand']
  %s0 = inlined_call_operand.hbm [shape: f32[8,32], index: 0, kind: input, shape index: {}]
  %s1 = inlined_call_operand.hbm [shape: f32[32,64], index: 1, kind: input, shape index: {}]
  %s2 = inlined_call_operand.vmem [shape: f32[1,64], index: 2, kind: input, shape index: {}]
  %s3 = inlined_call_operand.hbm [shape: f32[8,64], index: 3, kind: output, shape index: {}]
  %s4 = sld [smem:[#allocation0]]
  $region38: #{_fused_linear_pallas.1} parent=0
    _
  %s6 = ssub.s32 1, %s4
  %s7 = scalar_select 0, %s6, %s4
  $region1: #{_fused_linear_pallas.1} parent=0
    #allocation3 [shape = 'u8[4096]{0}', space=vmem, size = 0x1000, scoped, tag = 'input window, operand 0, single buffered']
    #allocation4 [shape = 's32[1]{0}', space=sflag, size = 0x4, scoped, tag = 'scoped memory for _fused_linear_pallas.1']
    #allocation5 [shape = 's32[1]{0}', space=sflag, size = 0x4, scoped, tag = 'scoped memory for _fused_linear_pallas.1']
    #allocation6 [shape = 'u8[16384]{0}', space=vmem, size = 0x4000, scoped, tag = 'input window, operand 1, single buffered']
    #allocation7 [shape = 's32[1]{0}', space=sflag, size = 0x4, scoped, tag = 'scoped memory for _fused_linear_pallas.1']
    #allocation8 [shape = 'u8[4096]{0}', space=vmem, size = 0x1000, scoped, tag = 'output window, operand 0, single buffered']
    %8 = vsyncpa [#allocation4], 0
    %9 = vsyncpa [#allocation7], 0
    %10 = vsyncpa [#allocation5], 0
    // Predicated region
    $region2: #{_fused_linear_pallas.1} parent=1 // pred_check
      _
    $region3: #{_fused_linear_pallas.1} parent=1 // pred_check_branch
      %12 = sbr.rel (0) target = $region5
    $region4: #{_fused_linear_pallas.1} parent=1 // pred_region
      %s14 = ssub.s32 128, 128
      %15 = vsyncadd [#allocation4], %s14
      %s17 = sshll.u32 [#allocation3], 4
      %s18 = int_to_ptr.vmem [resolvable:$true] %s17
      %20 = dma.hbm_to_vmem [thread:$0]  %s0, 128, %s18, [#allocation4]
    $region5: #{_fused_linear_pallas.1} parent=1 // pred_fallthru
      _
    // Predicated region
    $region6: #{_fused_linear_pallas.1} parent=1 // pred_check
      _
    $region7: #{_fused_linear_pallas.1} parent=1 // pred_check_branch
      %22 = sbr.rel (0) target = $region9
    $region8: #{_fused_linear_pallas.1} parent=1 // pred_region
      %s24 = ssub.s32 512, 512
      %25 = vsyncadd [#allocation7], %s24
      %s26 = sshll.u32 [#allocation6], 4
      %s27 = int_to_ptr.vmem [resolvable:$true] %s26
      %32 = dma.hbm_to_vmem [thread:$0]  %s1, 512, %s27, [#allocation7], 128, 128, 8
    $region9: #{_fused_linear_pallas.1} parent=1 // pred_fallthru
      _
    // Predicated region
    $region10: #{_fused_linear_pallas.1} parent=1 // pred_check
      _
    $region11: #{_fused_linear_pallas.1} parent=1 // pred_check_branch
      %34 = sbr.rel (0) target = $region13
    $region12: #{_fused_linear_pallas.1} parent=1 // pred_region
      _
    $region13: #{_fused_linear_pallas.1} parent=1 // pred_fallthru
      _
    // Predicated region
    $region14: #{_fused_linear_pallas.1} parent=1 // pred_check
      _
    $region15: #{_fused_linear_pallas.1} parent=1 // pred_check_branch
      %36 = sbr.rel (0) target = $region17
    $region16: #{_fused_linear_pallas.1} parent=1 // pred_region
      %37 = dma.done [#allocation4], 128
    $region17: #{_fused_linear_pallas.1} parent=1 // pred_fallthru
      _
    // Predicated region
    $region18: #{_fused_linear_pallas.1} parent=1 // pred_check
      _
    $region19: #{_fused_linear_pallas.1} parent=1 // pred_check_branch
      %39 = sbr.rel (0) target = $region21
    $region20: #{_fused_linear_pallas.1} parent=1 // pred_region
      %40 = dma.done [#allocation7], 512
    $region21: #{_fused_linear_pallas.1} parent=1 // pred_fallthru
      _
    %p41 = scmp.eq.s32.totalorder 0, 0
    // Predicated region
    $region22: #{_fused_linear_pallas.1} parent=1 // pred_check
      %p42 = pneg %p41
    $region23: #{_fused_linear_pallas.1} parent=1 // pred_check_branch
      %44 = sbr.rel (%p42) target = $region25
    $region24: #{_fused_linear_pallas.1} parent=1 // pred_region
      %v45 = vld [vmem:[%s2] sm:$0x1]
      %v47 = vlaneseq
      %v48 = vshrl.u32 %v47, 7
      %v49 = vsub.s32 0, %v48
      %v50 = vrot.slane %v45, %v49
      %vm52 = vcmask 523264
      %53 = vst.msk [vmem:[#allocation2] sm:$0xff] %vm52, %v50
    $region25: #{_fused_linear_pallas.1} parent=1 // pred_fallthru
      _
    %v54 = vld [vmem:[#allocation2] sm:$0xff]
    %v55 = vld [vmem:[#allocation3] sm:$0xff]
    %v56 = vld [vmem:[#allocation6] sm:$0xff]
    %v57 = vld [vmem:[#allocation6 + $0x8] sm:$0xff]
    %v58 = vld [vmem:[#allocation6 + $0x10] sm:$0xff]
    %v59 = vld [vmem:[#allocation6 + $0x18] sm:$0xff]
    %vm60 = vcmask 261120
    %v62 = vsel %vm60, %v55, 0
    %64 = vmatprep.subr.mxu0 0.0
    %65 = vmatpush1.msra.mxu0 0.0
    %66 = vmatprep.subr.mxu0 0.0
    %67 = vmatpush1.msra.mxu0 0.0
    %68 = vmatprep.subr.mxu0 0.0
    %69 = vmatpush1.msra.mxu0 0.0
    %70 = vmatprep.subr.mxu0 0.0
    %71 = vmatpush1.msra.mxu0 0.0
    %72 = vmatprep.subr.mxu0 0.0
    %73 = vmatpush1.msra.mxu0 0.0
    %74 = vmatprep.subr.mxu0 0.0
    %75 = vmatpush1.msra.mxu0 0.0
    %76 = vmatprep.subr.mxu0 0.0
    %77 = vmatpush1.msra.mxu0 0.0
    %78 = vmatprep.subr.mxu0 0.0
    %79 = vmatpush1.msra.mxu0 0.0
    %80 = vmatprep.subr.mxu0 0.0
    %81 = vmatpush1.msra.mxu0 0.0
    %82 = vmatprep.subr.mxu0 0.0
    %83 = vmatpush1.msra.mxu0 0.0
    %84 = vmatprep.subr.mxu0 0.0
    %85 = vmatpush1.msra.mxu0 0.0
    %86 = vmatprep.subr.mxu0 0.0
    %87 = vmatpush1.msra.mxu0 0.0
    %88 = vmatprep.subr.mxu0 0.0
    %89 = vmatpush1.msra.mxu0 %v59
    %90 = vmatprep.subr.mxu0 0.0
    %91 = vmatpush1.msra.mxu0 %v58
    %92 = vmatprep.subr.mxu0 0.0
    %93 = vmatpush1.msra.mxu0 %v57
    %94 = vmatprep.subr.mxu0 0.0
    %95 = vmatpush1.msra.mxu0 %v56
    %96 = vmatprep.subr.mxu0 0.0
    %97 = vmatpush2.msra.mxu0 0.0
    %98 = vmatprep.subr.mxu0 0.0
    %99 = vmatpush2.msra.mxu0 0.0
    %100 = vmatprep.subr.mxu0 0.0
    %101 = vmatpush2.msra.mxu0 0.0
    %102 = vmatprep.subr.mxu0 0.0
    %103 = vmatpush2.msra.mxu0 0.0
    %104 = vmatprep.subr.mxu0 0.0
    %105 = vmatpush2.msra.mxu0 0.0
    %106 = vmatprep.subr.mxu0 0.0
    %107 = vmatpush2.msra.mxu0 0.0
    %108 = vmatprep.subr.mxu0 0.0
    %109 = vmatpush2.msra.mxu0 0.0
    %110 = vmatprep.subr.mxu0 0.0
    %111 = vmatpush2.msra.mxu0 0.0
    %112 = vmatprep.subr.mxu0 0.0
    %113 = vmatpush2.msra.mxu0 0.0
    %114 = vmatprep.subr.mxu0 0.0
    %115 = vmatpush2.msra.mxu0 0.0
    %116 = vmatprep.subr.mxu0 0.0
    %117 = vmatpush2.msra.mxu0 0.0
    %118 = vmatprep.subr.mxu0 0.0
    %119 = vmatpush2.msra.mxu0 0.0
    %120 = vmatprep.subr.mxu0 0.0
    %121 = vmatpush2.msra.mxu0 0.0
    %122 = vmatprep.subr.mxu0 0.0
    %123 = vmatpush2.msra.mxu0 0.0
    %124 = vmatprep.subr.mxu0 0.0
    %125 = vmatpush2.msra.mxu0 0.0
    %126 = vmatprep.subr.mxu0 0.0
    %127 = vmatpush2.msra.mxu0 0.0
    %128 = vmatprep.mubr.f32.mxu0 0.0
    %129 = vmatmul.mubr.f32.gmra.mxu0 %v62
    %v130 = vpop.f32.mrf.mxu0
    %v131 = vadd.f32 0.0, %v130
    %v132 = vpop.f32.mrf.mxu0
    %133 = vdwg.mxu0
    %v134 = vadd.f32 %v54, %v131
    %vm135 = vcmask 523264
    %136 = vst.msk [vmem:[#allocation2] sm:$0xff] %vm135, %v134
    // Predicated region
    $region26: #{_fused_linear_pallas.1} parent=1 // pred_check
      %p137 = pneg %p41
    $region27: #{_fused_linear_pallas.1} parent=1 // pred_check_branch
      %139 = sbr.rel (%p137) target = $region29
    $region28: #{_fused_linear_pallas.1} parent=1 // pred_region
      %v140 = vld [vmem:[#allocation2] sm:$0xff]
      %141 = vst.msk [vmem:[#allocation8] sm:$0xff] %vm135, %v140
    $region29: #{_fused_linear_pallas.1} parent=1 // pred_fallthru
      _
    // Predicated region
    $region30: #{_fused_linear_pallas.1} parent=1 // pred_check
      _
    $region31: #{_fused_linear_pallas.1} parent=1 // pred_check_branch
      %143 = sbr.rel (0) target = $region33
    $region32: #{_fused_linear_pallas.1} parent=1 // pred_region
      %s145 = ssub.s32 128, 128
      %146 = vsyncadd [#allocation5], %s145
      %s148 = sshll.u32 [#allocation8], 4
      %s149 = int_to_ptr.vmem [resolvable:$true] %s148
      %151 = dma.vmem_to_hbm [thread:$0]  %s149, 128, %s3, [#allocation5]
    $region33: #{_fused_linear_pallas.1} parent=1 // pred_fallthru
      _
    // Predicated region
    $region34: #{_fused_linear_pallas.1} parent=1 // pred_check
      _
    $region35: #{_fused_linear_pallas.1} parent=1 // pred_check_branch
      %153 = sbr.rel (0) target = $region37
    $region36: #{_fused_linear_pallas.1} parent=1 // pred_region
      %154 = dma.done [#allocation5], 128
    $region37: #{_fused_linear_pallas.1} parent=1 // pred_fallthru
      _
    %155 = vsyncpa [#allocation4], 1
    %156 = vsyncpa [#allocation7], 1
    %157 = vsyncpa [#allocation5], 1

</llo_original>
